<compile_context>
chip_gen: v5e
topology: v5e:2x2
jax: 0.10.0
libtpu: 0.0.40
codegen_flags: <defaults>
</compile_context>

<pallas_src>
import functools

import jax
import jax.numpy as jnp
from jax import lax
from jax.experimental import pallas as pl
from jax.experimental.pallas import tpu as pltpu


def _lora_conv2d_kernel(x_ref, w_ref, b_ref, o_ref):
    # x_ref: (tile_m // g, g*KK*Cin)  packed im2col tile
    # w_ref: (g*KK*Cin, g*Cout)       block-diagonal fused weights (LoRA folded)
    # b_ref: (1, g*Cout)              f32 bias, tiled g times
    # o_ref: (tile_m // g, g*Cout)    packed output tile (lane-dense)
    acc = jnp.dot(x_ref[...], w_ref[...], preferred_element_type=jnp.float32)
    o_ref[...] = (acc + b_ref[...]).astype(o_ref.dtype)


def _round_up(v, m):
    return (v + m - 1) // m * m


def _pick_tile_m(m_total, kkcin, cout, itemsize):
    # ~24 MiB budget for the double-buffered input + output tiles
    # (safe on v5e/v6e 128 MiB and v7x 64 MiB VMEM).
    budget = 24 * 1024 * 1024
    per_row = 2 * (kkcin + cout) * itemsize
    t = budget // max(per_row, 1)
    t = min(t, 4096)
    # keep at least 2 grid steps when there is enough work (v7x megacore)
    t = min(t, max(256, _round_up(m_total, 2) // 2))
    t = max(256, (t // 256) * 256)
    return int(t)


def _pack_factor(cout):
    """Pixels packed per output row so the lane dim reaches 128 (unmasked vst)."""
    if cout >= 128:
        return 1
    g = 1
    while g * 2 * cout <= 128 and g * 2 <= 8:   # g | 256 (tile_m granularity)
        g *= 2
    return g


@functools.partial(jax.jit, static_argnames=("padding", "alpha", "r", "tile_m"))
def lora_conv2d(x, w_conv, bias, w_A, w_B, *, padding, alpha, r, tile_m=None):
    """Inference forward of LoRAConv2d.

    Supports stride-1 Conv2d with symmetric `padding` that preserves spatial
    dims (odd kernel, padding == (K-1)//2 — the fastmri U-Net conv-block
    configuration), which makes the LoRA fold into the centre tap exact.
    """
    N, Cin, H, W = x.shape
    Cout, Cin2, K, K2 = w_conv.shape
    assert Cin == Cin2 and K == K2
    P = int(padding)
    Ho, Wo = H + 2 * P - K + 1, W + 2 * P - K + 1
    assert (Ho, Wo) == (H, W) and K % 2 == 1 and P == (K - 1) // 2, \
        "LoRA fold requires a spatial-preserving conv (odd K, padding=(K-1)//2)"
    scaling = float(alpha) / float(r)
    KKCin = K * K * Cin
    M = N * Ho * Wo
    dtype = x.dtype

    # ---- glue: layout transforms in plain JAX (fused under jit) ------------
    x_nhwc = jnp.transpose(x, (0, 2, 3, 1))                        # (N,H,W,Cin)
    x_pad = jnp.pad(x_nhwc, ((0, 0), (P, P), (P, P), (0, 0)))
    patches = [x_pad[:, ki:ki + Ho, kj:kj + Wo, :]
               for ki in range(K) for kj in range(K)]
    x_col = jnp.concatenate(patches, axis=-1).reshape(M, KKCin)    # (M, KK*Cin)

    # Fused conv weight: row index = (ki*K + kj)*Cin + c, col index = o.
    w_flat = jnp.transpose(w_conv, (2, 3, 1, 0)).reshape(KKCin, Cout)
    # Fold LoRA (exact at inference): delta = x @ (scaling * A^T @ B^T).
    a_mat = w_A.reshape(r, Cin)
    b_mat = w_B.reshape(Cout, r)
    w_lora = scaling * jnp.dot(a_mat.T.astype(jnp.float32),
                               b_mat.T.astype(jnp.float32))
    center = (P * K + P) * Cin
    w_flat_f32 = (w_flat.astype(jnp.float32)
                  .at[center:center + Cin, :].add(w_lora))

    bias_f32 = (jnp.zeros((Cout,), jnp.float32) if bias is None
                else bias.astype(jnp.float32)).reshape(1, Cout)

    if tile_m is None:
        tile_m = _pick_tile_m(M, KKCin, Cout, jnp.dtype(dtype).itemsize)
    M_pad = _round_up(M, tile_m)
    if M_pad != M:
        x_col = jnp.pad(x_col, ((0, M_pad - M), (0, 0)))

    # ---- lane-dense packing (free, row-major contiguous reshapes) ----------
    g = _pack_factor(Cout)
    x_packed = x_col.reshape(M_pad // g, g * KKCin)
    # Block-diagonal weight: out row q packs pixels q*g .. q*g+g-1.
    w_packed = jnp.kron(jnp.eye(g, dtype=jnp.float32), w_flat_f32).astype(dtype)
    bias_packed = jnp.tile(bias_f32, (1, g))                       # (1, g*Cout)

    out_packed = pl.pallas_call(
        _lora_conv2d_kernel,
        out_shape=jax.ShapeDtypeStruct((M_pad // g, g * Cout), dtype),
        grid_spec=pltpu.PrefetchScalarGridSpec(
            num_scalar_prefetch=0,
            grid=(M_pad // tile_m,),
            in_specs=[
                pl.BlockSpec((tile_m // g, g * KKCin), lambda m: (m, 0)),
                pl.BlockSpec((g * KKCin, g * Cout), lambda m: (0, 0)),  # invariant
                pl.BlockSpec((1, g * Cout), lambda m: (0, 0)),          # invariant
            ],
            out_specs=pl.BlockSpec((tile_m // g, g * Cout), lambda m: (m, 0)),
        ),
        compiler_params=pltpu.CompilerParams(
            dimension_semantics=("parallel",),
            vmem_limit_bytes=48 * 1024 * 1024,
        ),
    )(x_packed, w_packed, bias_packed)

    out = out_packed.reshape(M_pad, Cout)[:M].reshape(N, Ho, Wo, Cout)
    return jnp.transpose(out, (0, 3, 1, 2))                        # NCHW


def reference_forward(x, w_conv, bias, w_A, w_B, *, padding, alpha, r):
    """Pure-JAX reference matching PyTorch semantics (eval mode)."""
    dn = ('NCHW', 'OIHW', 'NCHW')
    base = lax.conv_general_dilated(
        x, w_conv, (1, 1), [(padding, padding), (padding, padding)],
        dimension_numbers=dn)
    if bias is not None:
        base = base + bias[None, :, None, None]
    a = lax.conv_general_dilated(x, w_A, (1, 1), [(0, 0), (0, 0)],
                                 dimension_numbers=dn)
    delta = lax.conv_general_dilated(a, w_B, (1, 1), [(0, 0), (0, 0)],
                                     dimension_numbers=dn) * (float(alpha) / float(r))
    # F.interpolate branch unreachable for spatial-preserving conv.
    return base + delta


if __name__ == "__main__":
    # fastmri-U-Net-style conv-block config at small demo shapes.
    N, in_ch, out_ch = 2, 4, 32
    H = W = 16
    kernel_size, padding = 3, 1
    r, alpha, dropout = 4, 8.0, 0.0   # dropout inactive at inference

    key = jax.random.PRNGKey(0)
    kx, kw, kb, ka, kbb = jax.random.split(key, 5)

    x = jax.random.normal(kx, (N, in_ch, H, W), jnp.float32)
    # PyTorch Conv2d weight: (out_ch, in_ch, kH, kW)
    w_conv = jax.random.normal(kw, (out_ch, in_ch, kernel_size, kernel_size),
                               jnp.float32) * 0.1
    bias = jax.random.normal(kb, (out_ch,), jnp.float32) * 0.1
    # lora_A: Conv2d(in_ch, r, 1) -> (r, in_ch, 1, 1); lora_B: (out_ch, r, 1, 1)
    w_A = jax.random.normal(ka, (r, in_ch, 1, 1), jnp.float32) * 0.1
    w_B = jax.random.normal(kbb, (out_ch, r, 1, 1), jnp.float32) * 0.1

    out = lora_conv2d(x, w_conv, bias, w_A, w_B,
                      padding=padding, alpha=alpha, r=r)
    out = jax.block_until_ready(out)

    ref = reference_forward(x, w_conv, bias, w_A, w_B,
                            padding=padding, alpha=alpha, r=r)
    assert out.shape == (N, out_ch, H, W), out.shape
    assert jnp.allclose(out, ref, atol=1e-4, rtol=1e-4), \
        float(jnp.max(jnp.abs(out - ref)))
    print("KERNEL_OK")
</pallas_src>

<mosaic_0001>
module attributes {stable_mosaic.version = 11 : i64} {
  func.func @_lora_conv2d_kernel(%arg0: i32, %arg1: memref<64x144xf32, #tpu.memory_space<vmem>>, %arg2: memref<144x128xf32, #tpu.memory_space<vmem>>, %arg3: memref<1x128xf32, #tpu.memory_space<vmem>>, %arg4: memref<64x128xf32, #tpu.memory_space<vmem>>) attributes {dimension_semantics = [#tpu.dimension_semantics<parallel>], iteration_bounds = array<i64: 2>, scalar_prefetch = 0 : i64, scratch_operands = 0 : i64, tpu.core_type = #tpu.core_type<tc>, window_params = [{transform_indices = @transform_0, window_bounds = array<i64: 64, 144>}, {pipeline_mode = #tpu.pipeline_mode<synchronous>, transform_indices = @transform_1, window_bounds = array<i64: 144, 128>}, {pipeline_mode = #tpu.pipeline_mode<synchronous>, transform_indices = @transform_2, window_bounds = array<i64: 1, 128>}, {transform_indices = @transform_3, window_bounds = array<i64: 64, 128>}]} {
    %c0 = arith.constant 0 : index
    %c0_0 = arith.constant 0 : index
    %0 = vector.load %arg1[%c0, %c0_0] : memref<64x144xf32, #tpu.memory_space<vmem>>, vector<64x144xf32>
    %c0_1 = arith.constant 0 : index
    %c0_2 = arith.constant 0 : index
    %1 = vector.load %arg2[%c0_1, %c0_2] : memref<144x128xf32, #tpu.memory_space<vmem>>, vector<144x128xf32>
    %cst = arith.constant dense<0.000000e+00> : vector<64x128xf32>
    %2 = tpu.matmul %0, %1, %cst {dimension_numbers = #tpu.dot_dimension_numbers<[1], [0], [0], [1], [0, 0, 1, 1], [], []>} : vector<64x144xf32>, vector<144x128xf32>, vector<64x128xf32> -> vector<64x128xf32>
    %c0_3 = arith.constant 0 : index
    %c0_4 = arith.constant 0 : index
    %3 = vector.load %arg3[%c0_3, %c0_4] : memref<1x128xf32, #tpu.memory_space<vmem>>, vector<1x128xf32>
    %4 = vector.broadcast %3 : vector<1x128xf32> to vector<64x128xf32>
    %5 = arith.addf %2, %4 : vector<64x128xf32>
    %c0_5 = arith.constant 0 : index
    %c0_6 = arith.constant 0 : index
    %6 = vector.load %arg4[%c0_5, %c0_6] : memref<64x128xf32, #tpu.memory_space<vmem>>, vector<64x128xf32>
    tpu.vector_store %arg4[%c0_5, %c0_6], %5 {strides = array<i32>} : memref<64x128xf32, #tpu.memory_space<vmem>>, vector<64x128xf32>,
    return
  }
  func.func @transform_0(%arg0: i32) -> (i32, i32) {
    %c0_i32 = arith.constant 0 : i32
    %c0_i32_0 = arith.constant 0 : i32
    return %arg0, %c0_i32 : i32, i32
  }
  func.func @transform_1(%arg0: i32) -> (i32, i32) {
    %c0_i32 = arith.constant 0 : i32
    %c0_i32_0 = arith.constant 0 : i32
    %c0_i32_1 = arith.constant 0 : i32
    return %c0_i32, %c0_i32_0 : i32, i32
  }
  func.func @transform_2(%arg0: i32) -> (i32, i32) {
    %c0_i32 = arith.constant 0 : i32
    %c0_i32_0 = arith.constant 0 : i32
    %c0_i32_1 = arith.constant 0 : i32
    return %c0_i32, %c0_i32_0 : i32, i32
  }
  func.func @transform_3(%arg0: i32) -> (i32, i32) {
    %c0_i32 = arith.constant 0 : i32
    %c0_i32_0 = arith.constant 0 : i32
    return %arg0, %c0_i32 : i32, i32
  }
}

</mosaic_0001>

<llo_original>
// kernel: lora_conv2d.1
$region0: #{lora_conv2d.1}
  #allocation0 [shape = 'u32[]', space=smem, size = 0x4, offset = 0x4, fixed_abs, tag = 'smem constant byte address 0x4 - core index']
  #allocation1 [shape = 'u32[72,128]{1,0:T(1,128)}', space=vmem, size = 0x9000, scoped, tag = 'internal scratch']
  %s0 = inlined_call_operand.vmem [shape: f32[128,144], index: 0, kind: input, shape index: {}]
  %s1 = inlined_call_operand.vmem [shape: f32[144,128], index: 1, kind: input, shape index: {}]
  %s2 = inlined_call_operand.vmem [shape: f32[1,128], index: 2, kind: input, shape index: {}]
  %s3 = inlined_call_operand.vmem [shape: f32[128,128], index: 3, kind: output, shape index: {}]
  %s4 = sld [smem:[#allocation0]]
  $region45: #{lora_conv2d.1} parent=0
    _
  %s6 = ssub.s32 1, %s4
  %s7 = scalar_select 0, %s6, %s4
  loop: start=0, step=1, limit=4
  $region2: #{lora_conv2d.1} parent=0 // loop_pre_header
    _
  $region3: #{lora_conv2d.1} parent=0 // loop_header
    %s9 = sphi 0, %s13
    %p10 = scmp.ge.s32.totalorder %s9, 4
    %s19 = sphi 0, %s21
    %s22 = sphi 0, %s19
    %s23 = sphi 0, %s22
    %s39 = sphi 0, %s23
    %s43 = sphi 0, %s43
    %s45 = sphi 0, %s43
    %s46 = sphi 0, %s45
    %s60 = sphi 0, %s46
    %s64 = sphi 0, %s64
    %s66 = sphi 0, %s64
    %s67 = sphi 0, %s66
    %s81 = sphi 0, %s67
    %s87 = sphi 0, %s89
    %s90 = sphi 0, %s87
    %s91 = sphi 0, %s90
    %s107 = sphi 0, %s91
  $region4: #{lora_conv2d.1} parent=0 // loop_header_branch
    %12 = sbr.rel (%p10) target = $region8
  $region5: #{lora_conv2d.1} parent=0 // loop_body
    %s14 = ssub.s32 %s9, 1
    %s15 = ssub.s32 %s9, 2
    %s16 = sadd.s32 %s9, 1
    %s17 = ssub.s32 %s9, %s16
    %p18 = scmp.eq.s32.totalorder %s17, 0
    %s20 = sadd.s32 %s19, 1
    %s21 = scalar_select %p18, %s19, %s20
    %p24 = pneg %p18
    %p25 = scmp.eq.s32.totalorder %s9, 1
    %p26 = por %p24, %p25
    %p27 = scmp.ne.s32.totalorder %s19, %s22
    %p28 = scmp.eq.s32.totalorder %s9, 0
    %p29 = por %p27, %p28
    %p30 = scmp.ne.s32.totalorder %s19, %s22
    %p31 = scmp.eq.s32.totalorder %s14, 1
    %p32 = por %p30, %p31
    %p33 = scmp.ne.s32.totalorder %s22, %s23
    %p34 = scmp.eq.s32.totalorder %s14, 0
    %p35 = por %p33, %p34
    %p36 = scmp.ne.s32.totalorder %s22, %s23
    %p37 = scmp.eq.s32.totalorder %s15, 1
    %p38 = por %p36, %p37
    %p40 = scmp.ne.s32.totalorder %s23, %s39
    %p41 = scmp.eq.s32.totalorder %s15, 0
    %p42 = por %p40, %p41
    %s44 = sadd.s32 %s43, 1
    %p47 = scmp.eq.s32.totalorder %s9, 1
    %p48 = scmp.ne.s32.totalorder %s43, %s45
    %p49 = scmp.eq.s32.totalorder %s9, 0
    %p50 = por %p48, %p49
    %p51 = scmp.ne.s32.totalorder %s43, %s45
    %p52 = scmp.eq.s32.totalorder %s14, 1
    %p53 = por %p51, %p52
    %p54 = scmp.ne.s32.totalorder %s45, %s46
    %p55 = scmp.eq.s32.totalorder %s14, 0
    %p56 = por %p54, %p55
    %p57 = scmp.ne.s32.totalorder %s45, %s46
    %p58 = scmp.eq.s32.totalorder %s15, 1
    %p59 = por %p57, %p58
    %p61 = scmp.ne.s32.totalorder %s46, %s60
    %p62 = scmp.eq.s32.totalorder %s15, 0
    %p63 = por %p61, %p62
    %s65 = sadd.s32 %s64, 1
    %p68 = scmp.eq.s32.totalorder %s9, 1
    %p69 = scmp.ne.s32.totalorder %s64, %s66
    %p70 = scmp.eq.s32.totalorder %s9, 0
    %p71 = por %p69, %p70
    %p72 = scmp.ne.s32.totalorder %s64, %s66
    %p73 = scmp.eq.s32.totalorder %s14, 1
    %p74 = por %p72, %p73
    %p75 = scmp.ne.s32.totalorder %s66, %s67
    %p76 = scmp.eq.s32.totalorder %s14, 0
    %p77 = por %p75, %p76
    %p78 = scmp.ne.s32.totalorder %s66, %s67
    %p79 = scmp.eq.s32.totalorder %s15, 1
    %p80 = por %p78, %p79
    %p82 = scmp.ne.s32.totalorder %s67, %s81
    %p83 = scmp.eq.s32.totalorder %s15, 0
    %p84 = por %p82, %p83
    %s85 = ssub.s32 %s9, %s16
    %p86 = scmp.eq.s32.totalorder %s85, 0
    %s88 = sadd.s32 %s87, 1
    %s89 = scalar_select %p86, %s87, %s88
    %p92 = pneg %p86
    %p93 = scmp.eq.s32.totalorder %s9, 1
    %p94 = por %p92, %p93
    %p95 = scmp.ne.s32.totalorder %s87, %s90
    %p96 = scmp.eq.s32.totalorder %s9, 0
    %p97 = por %p95, %p96
    %p98 = scmp.ne.s32.totalorder %s87, %s90
    %p99 = scmp.eq.s32.totalorder %s14, 1
    %p100 = por %p98, %p99
    %p101 = scmp.ne.s32.totalorder %s90, %s91
    %p102 = scmp.eq.s32.totalorder %s14, 0
    %p103 = por %p101, %p102
    %p104 = scmp.ne.s32.totalorder %s90, %s91
    %p105 = scmp.eq.s32.totalorder %s15, 1
    %p106 = por %p104, %p105
    %p108 = scmp.ne.s32.totalorder %s91, %s107
    %p109 = scmp.eq.s32.totalorder %s15, 0
    %p110 = por %p108, %p109
    %p111 = scmp.le.s32.totalorder 1, %s9
    %p112 = scmp.lt.s32.totalorder %s9, 3
    %p113 = pnand %p111, %p112
    %p114 = pneg %p113
    // Predicated region
    $region9: #{lora_conv2d.1} parent=5 // pred_check
      _
    $region10: #{lora_conv2d.1} parent=5 // pred_check_branch
      %116 = sbr.rel (%p113) target = $region12
    $region11: #{lora_conv2d.1} parent=5 // pred_region
      %s117 = ssub.s32 %s9, 1
      // Predicated region
      $region13: #{lora_conv2d.1} parent=11 // pred_check
        %p118 = pneg %p56
      $region14: #{lora_conv2d.1} parent=11 // pred_check_branch
        %120 = sbr.rel (%p118) target = $region16
      $region15: #{lora_conv2d.1} parent=11 // pred_region
        _
      $region16: #{lora_conv2d.1} parent=11 // pred_fallthru
        _
      // Predicated region
      $region17: #{lora_conv2d.1} parent=11 // pred_check
        %p121 = pneg %p77
      $region18: #{lora_conv2d.1} parent=11 // pred_check_branch
        %123 = sbr.rel (%p121) target = $region20
      $region19: #{lora_conv2d.1} parent=11 // pred_region
        _
      $region20: #{lora_conv2d.1} parent=11 // pred_fallthru
        _
    $region12: #{lora_conv2d.1} parent=5 // pred_fallthru
      _
    %p124 = scmp.lt.s32.totalorder %s9, 2
    // Predicated region
    $region21: #{lora_conv2d.1} parent=5 // pred_check
      %p125 = pneg %p124
    $region22: #{lora_conv2d.1} parent=5 // pred_check_branch
      %127 = sbr.rel (%p125) target = $region24
    $region23: #{lora_conv2d.1} parent=5 // pred_region
      // Predicated region
      $region25: #{lora_conv2d.1} parent=23 // pred_check
        %p128 = pneg %p29
      $region26: #{lora_conv2d.1} parent=23 // pred_check_branch
        %130 = sbr.rel (%p128) target = $region28
      $region27: #{lora_conv2d.1} parent=23 // pred_region
        %s131 = smul.u32 8, %s9
        %p132 = scmp.lt.s32.totalorder %s131, 15
        %s133 = scalar_select %p132, %s131, 15
        %s134 = smul.addr %s133, 2
        %s135 = smul.addr %s134, 8
        %s136 = scalar_lea.vmem %s0, %s135
        %s137 = smul.u32 8, %s9
      $region28: #{lora_conv2d.1} parent=23 // pred_fallthru
        _
    $region24: #{lora_conv2d.1} parent=5 // pred_fallthru
      _
    %p138 = scmp.le.s32.totalorder 1, %s9
    %p139 = scmp.lt.s32.totalorder %s9, 3
    %p140 = pnand %p138, %p139
    %p141 = pneg %p140
    // Predicated region
    $region29: #{lora_conv2d.1} parent=5 // pred_check
      _
    $region30: #{lora_conv2d.1} parent=5 // pred_check_branch
      %143 = sbr.rel (%p140) target = $region32
    $region31: #{lora_conv2d.1} parent=5 // pred_region
      %s144 = ssub.s32 %s9, 1
      %s145 = smul.u32 8, %s14
      %p146 = scmp.lt.s32.totalorder %s145, 15
      %s147 = scalar_select %p146, %s145, 15
      %s148 = smul.addr %s147, 2
      %s149 = smul.addr %s148, 8
      %s150 = scalar_lea.vmem %s0, %s149
      %p151 = pneg %p35
      %p152 = pneg %p32
      %p153 = pneg %p56
      %p154 = pneg %p53
      %p155 = pneg %p77
      %p156 = pneg %p74
      %p157 = pneg %p103
      %p158 = pneg %p100
      %s159 = smul.u32 8, %s14
      %p160 = scmp.lt.s32.totalorder %s159, 15
      %s161 = scalar_select %p160, %s159, 15
      %s162 = smul.addr %s161, 8
      %s163 = scalar_lea.vmem %s3, %s162
      %s164 = smul.u32 8, %s14
      %p165 = scmp.lt.s32.totalorder %s164, 15
      %s166 = scalar_select %p165, %s164, 15
      %s167 = smul.addr %s166, 2
      %s168 = smul.addr %s167, 8
      %s169 = scalar_lea.vmem %s0, %s168
      %s170 = smul.u32 8, %s14
      %s171 = smul.u32 8, %s14
      %p172 = scmp.lt.s32.totalorder %s171, 15
      %s173 = scalar_select %p172, %s171, 15
      %s174 = smul.addr %s173, 8
      %s175 = scalar_lea.vmem %s3, %s174
      %s176 = smul.u32 8, %s14
      %v177 = vld [vmem:[%s169] sm:$0xff]
      %v178 = vld [vmem:[%s169 + $0x8] sm:$0xff]
      %v179 = vld [vmem:[%s169 + $0x10] sm:$0xff]
      %v180 = vld [vmem:[%s169 + $0x18] sm:$0xff]
      %v181 = vld [vmem:[%s169 + $0x20] sm:$0xff]
      %v182 = vld [vmem:[%s169 + $0x28] sm:$0xff]
      %v183 = vld [vmem:[%s169 + $0x30] sm:$0xff]
      %v184 = vld [vmem:[%s169 + $0x38] sm:$0xff]
      %v185 = vld [vmem:[%s169 + $0x40] sm:$0xff]
      %v186 = vld [vmem:[%s169 + $0x48] sm:$0xff]
      %v187 = vld [vmem:[%s169 + $0x50] sm:$0xff]
      %v188 = vld [vmem:[%s169 + $0x58] sm:$0xff]
      %v189 = vld [vmem:[%s169 + $0x60] sm:$0xff]
      %v190 = vld [vmem:[%s169 + $0x68] sm:$0xff]
      %v191 = vld [vmem:[%s169 + $0x70] sm:$0xff]
      %v192 = vld [vmem:[%s169 + $0x78] sm:$0xff]
      %v193 = vld [vmem:[%s1] sm:$0xff]
      %v194 = vld [vmem:[%s1 + $0x8] sm:$0xff]
      %v195 = vld [vmem:[%s1 + $0x10] sm:$0xff]
      %v196 = vld [vmem:[%s1 + $0x18] sm:$0xff]
      %v197 = vld [vmem:[%s1 + $0x20] sm:$0xff]
      %v198 = vld [vmem:[%s1 + $0x28] sm:$0xff]
      %v199 = vld [vmem:[%s1 + $0x30] sm:$0xff]
      %v200 = vld [vmem:[%s1 + $0x38] sm:$0xff]
      %v201 = vld [vmem:[%s1 + $0x40] sm:$0xff]
      %v202 = vld [vmem:[%s1 + $0x48] sm:$0xff]
      %v203 = vld [vmem:[%s1 + $0x50] sm:$0xff]
      %v204 = vld [vmem:[%s1 + $0x58] sm:$0xff]
      %v205 = vld [vmem:[%s1 + $0x60] sm:$0xff]
      %v206 = vld [vmem:[%s1 + $0x68] sm:$0xff]
      %v207 = vld [vmem:[%s1 + $0x70] sm:$0xff]
      %v208 = vld [vmem:[%s1 + $0x78] sm:$0xff]
      %v209 = vld [vmem:[%s1 + $0x80] sm:$0xff]
      %v210 = vld [vmem:[%s1 + $0x88] sm:$0xff]
      %v211 = vld [vmem:[%s2] sm:$0x1]
      %v213 = vperm.slane %v211, 0
      %vm215 = vcmask 130048
      %v217 = vsel %vm215, %v178, 0
      %v220 = vsel %vm215, %v180, 0
      %v223 = vsel %vm215, %v182, 0
      %v226 = vsel %vm215, %v184, 0
      %v229 = vsel %vm215, %v186, 0
      %v232 = vsel %vm215, %v188, 0
      %v235 = vsel %vm215, %v190, 0
      %v238 = vsel %vm215, %v192, 0
      %240 = vmatpush.msra.mxu0 %v208
      %241 = vmatpush.msra.mxu0 %v207
      %242 = vmatpush.msra.mxu0 %v206
      %243 = vmatpush.msra.mxu0 %v205
      %244 = vmatpush.msra.mxu0 %v204
      %245 = vmatpush.msra.mxu0 %v203
      %246 = vmatpush.msra.mxu0 %v202
      %247 = vmatpush.msra.mxu0 %v201
      %248 = vmatpush.msra.mxu0 %v200
      %249 = vmatpush.msra.mxu0 %v199
      %250 = vmatpush.msra.mxu0 %v198
      %251 = vmatpush.msra.mxu0 %v197
      %252 = vmatpush.msra.mxu0 %v196
      %253 = vmatpush.msra.mxu0 %v195
      %254 = vmatpush.msra.mxu0 %v194
      %255 = vmatpush.msra.mxu0 %v193
      %256 = vmatmul.f32.gmra.mxu0 %v177
      %v257 = vpop.f32.mrf.mxu0
      %v258 = vadd.f32 %v213, %v257
      %259 = vmatmul.f32.gmra.mxu0 %v179
      %v260 = vpop.f32.mrf.mxu0
      %v261 = vadd.f32 %v213, %v260
      %262 = vmatmul.f32.gmra.mxu0 %v181
      %v263 = vpop.f32.mrf.mxu0
      %v264 = vadd.f32 %v213, %v263
      %265 = vmatmul.f32.gmra.mxu0 %v183
      %v266 = vpop.f32.mrf.mxu0
      %v267 = vadd.f32 %v213, %v266
      %268 = vmatmul.f32.gmra.mxu0 %v185
      %v269 = vpop.f32.mrf.mxu0
      %v270 = vadd.f32 %v213, %v269
      %271 = vmatmul.f32.gmra.mxu0 %v187
      %v272 = vpop.f32.mrf.mxu0
      %v273 = vadd.f32 %v213, %v272
      %274 = vmatmul.f32.gmra.mxu0 %v189
      %v275 = vpop.f32.mrf.mxu0
      %v276 = vadd.f32 %v213, %v275
      %277 = vmatmul.f32.gmra.mxu0 %v191
      %v278 = vpop.f32.mrf.mxu0
      %v279 = vadd.f32 %v213, %v278
      %280 = vdwg.mxu0
      %281 = vmatpush.msra.mxu0 0.0
      %282 = vmatpush.msra.mxu0 0.0
      %283 = vmatpush.msra.mxu0 0.0
      %284 = vmatpush.msra.mxu0 0.0
      %285 = vmatpush.msra.mxu0 0.0
      %286 = vmatpush.msra.mxu0 0.0
      %287 = vmatpush.msra.mxu0 0.0
      %288 = vmatpush.msra.mxu0 0.0
      %289 = vmatpush.msra.mxu0 0.0
      %290 = vmatpush.msra.mxu0 0.0
      %291 = vmatpush.msra.mxu0 0.0
      %292 = vmatpush.msra.mxu0 0.0
      %293 = vmatpush.msra.mxu0 0.0
      %294 = vmatpush.msra.mxu0 0.0
      %295 = vmatpush.msra.mxu0 %v210
      %296 = vmatpush.msra.mxu0 %v209
      %297 = vmatmul.f32.gmra.mxu0 %v217
      %v298 = vpop.f32.mrf.mxu0
      %v299 = vadd.f32 %v258, %v298
      %300 = vmatmul.f32.gmra.mxu0 %v220
      %v301 = vpop.f32.mrf.mxu0
      %v302 = vadd.f32 %v261, %v301
      %303 = vmatmul.f32.gmra.mxu0 %v223
      %v304 = vpop.f32.mrf.mxu0
      %v305 = vadd.f32 %v264, %v304
      %306 = vmatmul.f32.gmra.mxu0 %v226
      %v307 = vpop.f32.mrf.mxu0
      %v308 = vadd.f32 %v267, %v307
      %309 = vmatmul.f32.gmra.mxu0 %v229
      %v310 = vpop.f32.mrf.mxu0
      %v311 = vadd.f32 %v270, %v310
      %312 = vmatmul.f32.gmra.mxu0 %v232
      %v313 = vpop.f32.mrf.mxu0
      %v314 = vadd.f32 %v273, %v313
      %315 = vmatmul.f32.gmra.mxu0 %v235
      %v316 = vpop.f32.mrf.mxu0
      %v317 = vadd.f32 %v276, %v316
      %318 = vmatmul.f32.gmra.mxu0 %v238
      %v319 = vpop.f32.mrf.mxu0
      %v320 = vadd.f32 %v279, %v319
      %321 = vdwg.mxu0
      %322 = vst [vmem:[%s175] sm:$0xff] %v299
      %323 = vst [vmem:[%s175 + $0x8] sm:$0xff] %v302
      %324 = vst [vmem:[%s175 + $0x10] sm:$0xff] %v305
      %325 = vst [vmem:[%s175 + $0x18] sm:$0xff] %v308
      %326 = vst [vmem:[%s175 + $0x20] sm:$0xff] %v311
      %327 = vst [vmem:[%s175 + $0x28] sm:$0xff] %v314
      %328 = vst [vmem:[%s175 + $0x30] sm:$0xff] %v317
      %329 = vst [vmem:[%s175 + $0x38] sm:$0xff] %v320
      %s330 = smul.u32 8, %s14
      %p331 = scmp.lt.s32.totalorder %s330, 15
      %s332 = scalar_select %p331, %s330, 15
      %s333 = smul.addr %s332, 8
      %s334 = scalar_lea.vmem %s3, %s333
      // Predicated region
      $region33: #{lora_conv2d.1} parent=31 // pred_check
        %p335 = pneg %p100
      $region34: #{lora_conv2d.1} parent=31 // pred_check_branch
        %337 = sbr.rel (%p335) target = $region36
      $region35: #{lora_conv2d.1} parent=31 // pred_region
        %s338 = smul.u32 8, %s14
      $region36: #{lora_conv2d.1} parent=31 // pred_fallthru
        _
    $region32: #{lora_conv2d.1} parent=5 // pred_fallthru
      _
    %p339 = scmp.le.s32.totalorder 2, %s9
    // Predicated region
    $region37: #{lora_conv2d.1} parent=5 // pred_check
      %p340 = pneg %p339
    $region38: #{lora_conv2d.1} parent=5 // pred_check_branch
      %342 = sbr.rel (%p340) target = $region40
    $region39: #{lora_conv2d.1} parent=5 // pred_region
      %s343 = ssub.s32 %s9, 2
      // Predicated region
      $region41: #{lora_conv2d.1} parent=39 // pred_check
        %p344 = pneg %p106
      $region42: #{lora_conv2d.1} parent=39 // pred_check_branch
        %346 = sbr.rel (%p344) target = $region44
      $region43: #{lora_conv2d.1} parent=39 // pred_region
        %s347 = smul.u32 8, %s15
        %p348 = scmp.lt.s32.totalorder %s347, 15
        %s349 = scalar_select %p348, %s347, 15
        %s350 = smul.addr %s349, 8
        %s351 = scalar_lea.vmem %s3, %s350
      $region44: #{lora_conv2d.1} parent=39 // pred_fallthru
        _
    $region40: #{lora_conv2d.1} parent=5 // pred_fallthru
      _
  $region6: #{lora_conv2d.1} parent=0 // loop_footer
    %s13 = sadd.s32 1, %s9
  $region7: #{lora_conv2d.1} parent=0 // loop_footer_branch
    %8 = sbr.rel target = $region3
  $region8: #{lora_conv2d.1} parent=0 // loop_exit
    _

</llo_original>
